<compile_context>
chip_gen: v7x
topology: tpu7x:2x2x1
jax: 0.10.0
libtpu: 0.0.40
codegen_flags: <defaults>
</compile_context>

<pallas_src>
import math

import jax
import jax.numpy as jnp
from jax.experimental import pallas as pl
from jax.experimental.pallas import tpu as pltpu

# Problem sizes implied by the module's globals / forward args.
BATCH = 3
SEQ = 4
D_MODEL = 16
HEAD = 8
D_K = D_MODEL // HEAD           # 2
N_TOK = BATCH * SEQ             # 12 tokens
NPAD = ((N_TOK + 7) // 8) * 8   # 16: sublane-aligned token rows
BPAD = ((BATCH + 7) // 8) * 8   # 8:  sublane-aligned batch rows
SH = SEQ * HEAD                 # 32: (key-pos, head) flattened lane width


def mha_kernel(xq_ref, xk_ref, wq_ref, wkv_ref, wo_ref, bo_ref, o_ref):
    """Fused MHA forward, single program.

       xq_ref : (NPAD, D+1)       bf16  token rows [x | 1]   (Q operand)
       xk_ref : (BPAD, S*(D+1))   bf16  batch rows, (key-pos, feature) on lanes
       wq_ref : (D+1, 2*S*H)      bf16  Wq d-major, pre-tiled over key pos, bias row folded
       wkv_ref: (S*(D+1), 4*S*H)  bf16  block-diag over key pos, sections [k0|k1|v0|v1]
       wo_ref : (2*S*H, D)        bf16  Wo rows d-major, tiled over key pos (j-sum in MXU)
       bo_ref : (1, D)            f32
       o_ref  : (B*S, D)
    """
    B, S, H = BATCH, SEQ, HEAD
    n = B * S

    # ---- Fused projections: two MXU passes, biases folded via the ones lane. ----
    qb = jnp.dot(xq_ref[...], wq_ref[...], preferred_element_type=jnp.float32)   # (NPAD, 2*SH)
    kv = jnp.dot(xk_ref[...], wkv_ref[...], preferred_element_type=jnp.float32)  # (BPAD, 4*SH)

    # Rows 12..15 of qb / 3..7 of kv are padding garbage (bias-only / zero);
    # they are sliced away here and never enter any reduction.
    qb = qb[0:n].reshape(B, S, 2 * SH)   # lanes: [d0 | d1], each = key-pos j * H + head h
    kv = kv[0:B].reshape(B, 1, 4 * SH)   # lanes: [k_d0 | k_d1 | v_d0 | v_d1], broadcast over Sq

    # ---- Scores: d_k == 2 contraction as two lane-aligned VPU FMAs. ----
    scores = (qb[..., 0:SH] * kv[..., 0:SH] +
              qb[..., SH:2 * SH] * kv[..., SH:2 * SH]) * (1.0 / math.sqrt(D_K))  # (B, Sq, SH)

    # ---- ONE softmax over key position j = lane blocks of width H. ----
    def blockreduce(x, op):              # reduce the S blocks of H lanes
        acc = x[..., 0:H]
        for j in range(1, S):
            acc = op(acc, x[..., j * H:(j + 1) * H])
        return acc

    def blockbcast(x):                   # broadcast an H-lane slab back to S*H lanes
        return jnp.concatenate([x] * S, axis=-1)

    m = blockreduce(scores, jnp.maximum)                              # (B, Sq, H)
    e = jnp.exp(scores - blockbcast(m))                               # (B, Sq, SH)
    denom = blockreduce(e, jnp.add)                                   # (B, Sq, H)
    attn = e * blockbcast(pl.reciprocal(denom, approx=True))          # EUP reciprocal

    # ---- attn @ V, head concat and output projection fused into the MXU. ----
    # p_d[row, j*H+h] = attn[b,h,i,j] * v_d[b,j,h]; the sum over j and the
    # per-head mixing both happen inside the contraction with the tiled Wo rows.
    p0 = (attn * kv[..., 2 * SH:3 * SH]).reshape(n, SH).astype(jnp.bfloat16)
    p1 = (attn * kv[..., 3 * SH:4 * SH]).reshape(n, SH).astype(jnp.bfloat16)
    wo = wo_ref[...]
    out = (jnp.dot(p0, wo[0:SH, :], preferred_element_type=jnp.float32)
           + jnp.dot(p1, wo[SH:2 * SH, :], preferred_element_type=jnp.float32)
           + bo_ref[...])
    o_ref[...] = out.astype(o_ref.dtype)   # single (12, 16) store (unpadded on purpose)


def _head_perm():
    # perm[d*H + h] = h*D_K + d : maps the module's head-major feature order to
    # the kernel's d-major order so each d-slice is a contiguous lane block.
    return jnp.arange(D_MODEL).reshape(HEAD, D_K).T.reshape(-1)


def pack_params(params):
    """One-time (NOT in the per-call path) packing of the static weights.

    params: dict with wq, bq, wk, bk, wv, bv, wo, bo; weights are (D_in, D_out)
    (x @ W + b == PyTorch Linear with W_pt = W.T); biases are (1, D).
    NOTE: this packing (head permutation, bias rows, block-diagonal K/V slab,
    tiled Wo rows) is load-bearing — the kernel's lane layout depends on it.
    """
    D, H, S = D_MODEL, HEAD, SEQ
    perm = _head_perm()

    def aug(w, b):  # permute columns to d-major and fold the bias in as a last input row
        return jnp.concatenate([w[:, perm], b[:, perm]], axis=0)        # (D+1, D)

    wq_a = aug(params["wq"], params["bq"])
    wk_a = aug(params["wk"], params["bk"])
    wv_a = aug(params["wv"], params["bv"])

    # WQ: (D+1, 2*S*H).  Each d-half of the Q weights is tiled S times across
    # the key-position lane blocks, so qb comes out already broadcast over j.
    wq_big = jnp.concatenate(
        [jnp.concatenate([wq_a[:, 0:H]] * S, axis=1),
         jnp.concatenate([wq_a[:, H:2 * H]] * S, axis=1)], axis=1)      # (17, 64)

    # WKV: (S*(D+1), 4*S*H), block-diagonal over key position j so the MXU
    # output lanes are already (key-pos, head)-flattened.  Sections: k0,k1,v0,v1.
    kv_a = jnp.concatenate([wk_a[:, 0:H], wk_a[:, H:2 * H],
                            wv_a[:, 0:H], wv_a[:, H:2 * H]], axis=1)    # (17, 32)
    wkv_big = jnp.zeros((S * (D + 1), 4 * S * H), jnp.float32)
    for j in range(S):
        for sec in range(4):
            wkv_big = wkv_big.at[
                j * (D + 1):(j + 1) * (D + 1),
                sec * S * H + j * H: sec * S * H + (j + 1) * H
            ].set(kv_a[:, sec * H:(sec + 1) * H])                       # (68, 128)

    # WO: (2*S*H, D).  Rows are d-major Wo rows tiled over key position so the
    # sum over j folds into the output-projection contraction.
    wo_p = params["wo"][perm, :]                                        # (16, 16)
    wo_big = jnp.concatenate(
        [jnp.concatenate([wo_p[0:H, :]] * S, axis=0),
         jnp.concatenate([wo_p[H:2 * H, :]] * S, axis=0)], axis=0)      # (64, 16)

    return {"wq": wq_big.astype(jnp.bfloat16),
            "wkv": wkv_big.astype(jnp.bfloat16),
            "wo": wo_big.astype(jnp.bfloat16),
            "bo": params["bo"].astype(jnp.float32)}


@jax.jit
def multi_head_attention(query, packed):
    """Self-attention specialization (the module's call site passes the same
    tensor as Q, K and V).  `packed` is the output of pack_params()."""
    B, S, D = query.shape
    assert (B, S, D) == (BATCH, SEQ, D_MODEL)
    n = B * S

    x = query.reshape(n, D).astype(jnp.float32)
    x1 = jnp.concatenate([x, jnp.ones((n, 1), jnp.float32)], axis=1)     # ones lane folds biases
    xq = jnp.pad(x1, ((0, NPAD - n), (0, 0))).astype(jnp.bfloat16)       # (16, 17) token-major
    xk = jnp.pad(x1.reshape(B, S * (D + 1)),
                 ((0, BPAD - B), (0, 0))).astype(jnp.bfloat16)           # (8, 68) batch-major

    vmem = pl.BlockSpec(memory_space=pltpu.MemorySpace.VMEM)
    out2d = pl.pallas_call(
        mha_kernel,
        out_shape=jax.ShapeDtypeStruct((n, D), query.dtype),
        in_specs=[vmem] * 6,
        out_specs=vmem,
    )(xq, xk, packed["wq"], packed["wkv"], packed["wo"], packed["bo"])
    return out2d.reshape(B, S, D)


def reference_mha(query, key, value, params):
    """Pure-JAX reference matching the PyTorch forward semantics."""
    B, S, D = query.shape
    q = query @ params["wq"] + params["bq"]
    k = key @ params["wk"] + params["bk"]
    v = value @ params["wv"] + params["bv"]
    q = q.reshape(B, S, HEAD, D_K).transpose(0, 2, 1, 3)
    k = k.reshape(B, S, HEAD, D_K).transpose(0, 2, 1, 3)
    v = v.reshape(B, S, HEAD, D_K).transpose(0, 2, 1, 3)
    scores = jnp.einsum("bhqd,bhkd->bhqk", q, k) / math.sqrt(D_K)
    attn = jax.nn.softmax(scores, axis=-1)
    ctx = jnp.einsum("bhqk,bhkd->bhqd", attn, v)
    ctx = ctx.transpose(0, 2, 1, 3).reshape(B, S, D)
    return ctx @ params["wo"] + params["bo"]


def init_params(key):
    """Deterministic synthetic parameters (stand-in for nn.Linear init)."""
    ks = jax.random.split(key, 8)
    bound = 1.0 / math.sqrt(D_MODEL)

    def u(k, shape):
        return jax.random.uniform(k, shape, jnp.float32, -bound, bound)

    return {
        "wq": u(ks[0], (D_MODEL, D_MODEL)), "bq": u(ks[1], (1, D_MODEL)),
        "wk": u(ks[2], (D_MODEL, D_MODEL)), "bk": u(ks[3], (1, D_MODEL)),
        "wv": u(ks[4], (D_MODEL, D_MODEL)), "bv": u(ks[5], (1, D_MODEL)),
        "wo": u(ks[6], (D_MODEL, D_MODEL)), "bo": u(ks[7], (1, D_MODEL)),
    }


if __name__ == "__main__":
    root = jax.random.PRNGKey(0)
    k_q, k_p = jax.random.split(root, 2)

    # In the PyTorch script, query is torch.randn(3, 4, 16) and the same tensor
    # is used as Q, K and V (self-attention).
    query = jax.random.normal(k_q, (BATCH, SEQ, D_MODEL), jnp.float32)

    params = init_params(k_p)
    packed = pack_params(params)   # one-time packing, outside the per-call jitted path

    out = multi_head_attention(query, packed)
    out = jax.block_until_ready(out)

    ref = reference_mha(query, query, query, params)
    assert out.shape == (BATCH, SEQ, D_MODEL)
    # Tolerance budget: bf16 MXU operands (~1e-2 worst-case on these magnitudes)
    # + EUP approximate reciprocal in the softmax denominator.  Structural bugs
    # (packing / permutation mistakes) would show up as O(0.1-1) errors.
    err = float(jnp.max(jnp.abs(out - ref)))
    assert jnp.allclose(out, ref, atol=2e-2, rtol=2e-2), f"mismatch vs reference, max|err|={err}"

    print("KERNEL_OK")
</pallas_src>

<mosaic_0001>
module attributes {stable_mosaic.version = 11 : i64} {
  func.func @mha_kernel(%arg0: memref<16x17xbf16, #tpu.memory_space<vmem>>, %arg1: memref<8x68xbf16, #tpu.memory_space<vmem>>, %arg2: memref<17x64xbf16, #tpu.memory_space<vmem>>, %arg3: memref<68x128xbf16, #tpu.memory_space<vmem>>, %arg4: memref<64x16xbf16, #tpu.memory_space<vmem>>, %arg5: memref<1x16xf32, #tpu.memory_space<vmem>>, %arg6: memref<12x16xf32, #tpu.memory_space<vmem>>) attributes {dimension_semantics = [], scalar_prefetch = 0 : i64, scratch_operands = 0 : i64, tpu.core_type = #tpu.core_type<tc>} {
    %c0 = arith.constant 0 : index
    %c0_0 = arith.constant 0 : index
    %0 = vector.load %arg0[%c0, %c0_0] : memref<16x17xbf16, #tpu.memory_space<vmem>>, vector<16x17xbf16>
    %c0_1 = arith.constant 0 : index
    %c0_2 = arith.constant 0 : index
    %1 = vector.load %arg2[%c0_1, %c0_2] : memref<17x64xbf16, #tpu.memory_space<vmem>>, vector<17x64xbf16>
    %cst = arith.constant dense<0.000000e+00> : vector<16x64xf32>
    %2 = tpu.matmul %0, %1, %cst {dimension_numbers = #tpu.dot_dimension_numbers<[1], [0], [0], [1], [0, 0, 1, 1], [], []>} : vector<16x17xbf16>, vector<17x64xbf16>, vector<16x64xf32> -> vector<16x64xf32>
    %c0_3 = arith.constant 0 : index
    %c0_4 = arith.constant 0 : index
    %3 = vector.load %arg1[%c0_3, %c0_4] : memref<8x68xbf16, #tpu.memory_space<vmem>>, vector<8x68xbf16>
    %c0_5 = arith.constant 0 : index
    %c0_6 = arith.constant 0 : index
    %4 = vector.load %arg3[%c0_5, %c0_6] : memref<68x128xbf16, #tpu.memory_space<vmem>>, vector<68x128xbf16>
    %cst_7 = arith.constant dense<0.000000e+00> : vector<8x128xf32>
    %5 = tpu.matmul %3, %4, %cst_7 {dimension_numbers = #tpu.dot_dimension_numbers<[1], [0], [0], [1], [0, 0, 1, 1], [], []>} : vector<8x68xbf16>, vector<68x128xbf16>, vector<8x128xf32> -> vector<8x128xf32>
    %6 = vector.extract_strided_slice %2 {offsets = [0, 0], sizes = [12, 64], strides = [1, 1]} : vector<16x64xf32> to vector<12x64xf32>
    %7 = vector.shape_cast %6 : vector<12x64xf32> to vector<3x4x64xf32>
    %8 = vector.extract_strided_slice %5 {offsets = [0, 0], sizes = [3, 128], strides = [1, 1]} : vector<8x128xf32> to vector<3x128xf32>
    %9 = vector.shape_cast %8 : vector<3x128xf32> to vector<3x1x128xf32>
    %10 = vector.extract_strided_slice %7 {offsets = [0, 0, 0], sizes = [3, 4, 32], strides = [1, 1, 1]} : vector<3x4x64xf32> to vector<3x4x32xf32>
    %11 = vector.extract_strided_slice %9 {offsets = [0, 0, 0], sizes = [3, 1, 32], strides = [1, 1, 1]} : vector<3x1x128xf32> to vector<3x1x32xf32>
    %12 = vector.broadcast %11 : vector<3x1x32xf32> to vector<3x4x32xf32>
    %13 = arith.mulf %10, %12 : vector<3x4x32xf32>
    %14 = vector.extract_strided_slice %7 {offsets = [0, 0, 32], sizes = [3, 4, 32], strides = [1, 1, 1]} : vector<3x4x64xf32> to vector<3x4x32xf32>
    %15 = vector.extract_strided_slice %9 {offsets = [0, 0, 32], sizes = [3, 1, 32], strides = [1, 1, 1]} : vector<3x1x128xf32> to vector<3x1x32xf32>
    %16 = vector.broadcast %15 : vector<3x1x32xf32> to vector<3x4x32xf32>
    %17 = arith.mulf %14, %16 : vector<3x4x32xf32>
    %18 = arith.addf %13, %17 : vector<3x4x32xf32>
    %cst_8 = arith.constant 0.707106769 : f32
    %19 = vector.broadcast %cst_8 : f32 to vector<3x4x32xf32>
    %20 = arith.mulf %18, %19 : vector<3x4x32xf32>
    %21 = vector.extract_strided_slice %20 {offsets = [0, 0, 0], sizes = [3, 4, 8], strides = [1, 1, 1]} : vector<3x4x32xf32> to vector<3x4x8xf32>
    %22 = vector.extract_strided_slice %20 {offsets = [0, 0, 8], sizes = [3, 4, 8], strides = [1, 1, 1]} : vector<3x4x32xf32> to vector<3x4x8xf32>
    %23 = arith.maximumf %21, %22 : vector<3x4x8xf32>
    %24 = vector.extract_strided_slice %20 {offsets = [0, 0, 16], sizes = [3, 4, 8], strides = [1, 1, 1]} : vector<3x4x32xf32> to vector<3x4x8xf32>
    %25 = arith.maximumf %23, %24 : vector<3x4x8xf32>
    %26 = vector.extract_strided_slice %20 {offsets = [0, 0, 24], sizes = [3, 4, 8], strides = [1, 1, 1]} : vector<3x4x32xf32> to vector<3x4x8xf32>
    %27 = arith.maximumf %25, %26 : vector<3x4x8xf32>
    %28 = tpu.concatenate %27, %27, %27, %27 in 2 : vector<3x4x8xf32>, vector<3x4x8xf32>, vector<3x4x8xf32>, vector<3x4x8xf32> -> vector<3x4x32xf32>
    %29 = arith.subf %20, %28 : vector<3x4x32xf32>
    %30 = math.exp %29 : vector<3x4x32xf32>
    %31 = vector.extract_strided_slice %30 {offsets = [0, 0, 0], sizes = [3, 4, 8], strides = [1, 1, 1]} : vector<3x4x32xf32> to vector<3x4x8xf32>
    %32 = vector.extract_strided_slice %30 {offsets = [0, 0, 8], sizes = [3, 4, 8], strides = [1, 1, 1]} : vector<3x4x32xf32> to vector<3x4x8xf32>
    %33 = arith.addf %31, %32 : vector<3x4x8xf32>
    %34 = vector.extract_strided_slice %30 {offsets = [0, 0, 16], sizes = [3, 4, 8], strides = [1, 1, 1]} : vector<3x4x32xf32> to vector<3x4x8xf32>
    %35 = arith.addf %33, %34 : vector<3x4x8xf32>
    %36 = vector.extract_strided_slice %30 {offsets = [0, 0, 24], sizes = [3, 4, 8], strides = [1, 1, 1]} : vector<3x4x32xf32> to vector<3x4x8xf32>
    %37 = arith.addf %35, %36 : vector<3x4x8xf32>
    %38 = tpu.reciprocal %37 {approx = true} : vector<3x4x8xf32> -> vector<3x4x8xf32>
    %39 = tpu.concatenate %38, %38, %38, %38 in 2 : vector<3x4x8xf32>, vector<3x4x8xf32>, vector<3x4x8xf32>, vector<3x4x8xf32> -> vector<3x4x32xf32>
    %40 = arith.mulf %30, %39 : vector<3x4x32xf32>
    %41 = vector.extract_strided_slice %9 {offsets = [0, 0, 64], sizes = [3, 1, 32], strides = [1, 1, 1]} : vector<3x1x128xf32> to vector<3x1x32xf32>
    %42 = vector.broadcast %41 : vector<3x1x32xf32> to vector<3x4x32xf32>
    %43 = arith.mulf %40, %42 : vector<3x4x32xf32>
    %44 = vector.shape_cast %43 : vector<3x4x32xf32> to vector<12x32xf32>
    %45 = arith.truncf %44 : vector<12x32xf32> to vector<12x32xbf16>
    %46 = vector.extract_strided_slice %9 {offsets = [0, 0, 96], sizes = [3, 1, 32], strides = [1, 1, 1]} : vector<3x1x128xf32> to vector<3x1x32xf32>
    %47 = vector.broadcast %46 : vector<3x1x32xf32> to vector<3x4x32xf32>
    %48 = arith.mulf %40, %47 : vector<3x4x32xf32>
    %49 = vector.shape_cast %48 : vector<3x4x32xf32> to vector<12x32xf32>
    %50 = arith.truncf %49 : vector<12x32xf32> to vector<12x32xbf16>
    %c0_9 = arith.constant 0 : index
    %c0_10 = arith.constant 0 : index
    %51 = vector.load %arg4[%c0_9, %c0_10] : memref<64x16xbf16, #tpu.memory_space<vmem>>, vector<64x16xbf16>
    %52 = vector.extract_strided_slice %51 {offsets = [0, 0], sizes = [32, 16], strides = [1, 1]} : vector<64x16xbf16> to vector<32x16xbf16>
    %cst_11 = arith.constant dense<0.000000e+00> : vector<12x16xf32>
    %53 = tpu.matmul %45, %52, %cst_11 {dimension_numbers = #tpu.dot_dimension_numbers<[1], [0], [0], [1], [0, 0, 1, 1], [], []>} : vector<12x32xbf16>, vector<32x16xbf16>, vector<12x16xf32> -> vector<12x16xf32>
    %54 = vector.extract_strided_slice %51 {offsets = [32, 0], sizes = [32, 16], strides = [1, 1]} : vector<64x16xbf16> to vector<32x16xbf16>
    %cst_12 = arith.constant dense<0.000000e+00> : vector<12x16xf32>
    %55 = tpu.matmul %50, %54, %cst_12 {dimension_numbers = #tpu.dot_dimension_numbers<[1], [0], [0], [1], [0, 0, 1, 1], [], []>} : vector<12x32xbf16>, vector<32x16xbf16>, vector<12x16xf32> -> vector<12x16xf32>
    %56 = arith.addf %53, %55 : vector<12x16xf32>
    %c0_13 = arith.constant 0 : index
    %c0_14 = arith.constant 0 : index
    %57 = vector.load %arg5[%c0_13, %c0_14] : memref<1x16xf32, #tpu.memory_space<vmem>>, vector<1x16xf32>
    %58 = vector.broadcast %57 : vector<1x16xf32> to vector<12x16xf32>
    %59 = arith.addf %56, %58 : vector<12x16xf32>
    %c0_15 = arith.constant 0 : index
    %c0_16 = arith.constant 0 : index
    %60 = vector.load %arg6[%c0_15, %c0_16] : memref<12x16xf32, #tpu.memory_space<vmem>>, vector<12x16xf32>
    tpu.vector_store %arg6[%c0_15, %c0_16], %59 {strides = array<i32>} : memref<12x16xf32, #tpu.memory_space<vmem>>, vector<12x16xf32>,
    return
  }
}

</mosaic_0001>

<llo_original>
// kernel: multi_head_attention.1
$region0: #{multi_head_attention.1}
  #allocation0 [shape = 'u32[]', space=smem, size = 0x4, offset = 0x4, fixed_abs, tag = 'smem constant byte address 0x4 - core index']
  #allocation1 [shape = 'u32[144,128]{1,0:T(1,128)}', space=vmem, size = 0x12000, scoped, tag = 'internal scratch']
  %s0 = inlined_call_operand.vmem [shape: bf16[16,17], index: 0, kind: input, shape index: {}]
  %s1 = inlined_call_operand.vmem [shape: bf16[8,68], index: 1, kind: input, shape index: {}]
  %s2 = inlined_call_operand.vmem [shape: bf16[17,64], index: 2, kind: input, shape index: {}]
  %s3 = inlined_call_operand.vmem [shape: bf16[68,128], index: 3, kind: input, shape index: {}]
  %s4 = inlined_call_operand.vmem [shape: bf16[64,16], index: 4, kind: input, shape index: {}]
  %s5 = inlined_call_operand.vmem [shape: f32[1,16], index: 5, kind: input, shape index: {}]
  %s6 = inlined_call_operand.vmem [shape: f32[12,16], index: 6, kind: output, shape index: {}]
  %s7 = sld [smem:[#allocation0]]
  $region34: #{multi_head_attention.1} parent=0
    _
  %s9 = ssub.s32 1, %s7
  %s10 = scalar_select 0, %s9, %s7
  // Predicated region
  $region2: #{multi_head_attention.1} parent=0 // pred_check
    _
  $region3: #{multi_head_attention.1} parent=0 // pred_check_branch
    %12 = sbr.rel (0) target = $region5
  $region4: #{multi_head_attention.1} parent=0 // pred_region
    _
  $region5: #{multi_head_attention.1} parent=0 // pred_fallthru
    _
  // Predicated region
  $region6: #{multi_head_attention.1} parent=0 // pred_check
    _
  $region7: #{multi_head_attention.1} parent=0 // pred_check_branch
    %14 = sbr.rel (0) target = $region9
  $region8: #{multi_head_attention.1} parent=0 // pred_region
    _
  $region9: #{multi_head_attention.1} parent=0 // pred_fallthru
    _
  // Predicated region
  $region10: #{multi_head_attention.1} parent=0 // pred_check
    _
  $region11: #{multi_head_attention.1} parent=0 // pred_check_branch
    %16 = sbr.rel (0) target = $region13
  $region12: #{multi_head_attention.1} parent=0 // pred_region
    _
  $region13: #{multi_head_attention.1} parent=0 // pred_fallthru
    _
  // Predicated region
  $region14: #{multi_head_attention.1} parent=0 // pred_check
    _
  $region15: #{multi_head_attention.1} parent=0 // pred_check_branch
    %18 = sbr.rel (0) target = $region17
  $region16: #{multi_head_attention.1} parent=0 // pred_region
    _
  $region17: #{multi_head_attention.1} parent=0 // pred_fallthru
    _
  // Predicated region
  $region18: #{multi_head_attention.1} parent=0 // pred_check
    _
  $region19: #{multi_head_attention.1} parent=0 // pred_check_branch
    %20 = sbr.rel (0) target = $region21
  $region20: #{multi_head_attention.1} parent=0 // pred_region
    _
  $region21: #{multi_head_attention.1} parent=0 // pred_fallthru
    _
  // Predicated region
  $region22: #{multi_head_attention.1} parent=0 // pred_check
    _
  $region23: #{multi_head_attention.1} parent=0 // pred_check_branch
    %22 = sbr.rel (0) target = $region25
  $region24: #{multi_head_attention.1} parent=0 // pred_region
    _
  $region25: #{multi_head_attention.1} parent=0 // pred_fallthru
    _
  %v24 = vld [vmem:[%s0] sm:$0xf]
  %v25 = vld [vmem:[%s0 + $0x4] sm:$0xf]
  %v26 = vld [vmem:[%s2] sm:$0xf]
  %v27 = vld [vmem:[%s2 + $0x4] sm:$0xf]
  %v28 = vld [vmem:[%s2 + $0x8] sm:$0x1]
  %v31 = vunpack.c.l.b16 %v24
  %v32 = vunpack.c.l.b16 %v25
  %v33 = vpack.c.b16 %v32, %v31
  %v37 = vunpack.c.l.b16 %v26
  %v38 = vunpack.c.l.b16 %v27
  %v39 = vunpack.c.l.b16 %v28
  %v40 = vpack.c.b16 %v38, %v37
  %v41 = vpack.c.b16 %v39, %v39
  %vm43 = vcmask 138240
  %v45 = vsel %vm43, %v33, 0
  %vm47 = vcmask 1040384
  %v48 = vsel 0, 4294967295, 65535
  %v49 = vsel %vm47, %v48, 0
  %v51 = vand.u32 %v41, %v49
  %53 = vmatprep.subr.bf16.mxu0 0
  %54 = vmatpush1.bf16.msra.mxu0 %v40
  %55 = vmatprep.subr.bf16.mxu0 0
  %56 = vmatpush1.bf16.msra.mxu0 %v51
  %57 = vmatprep.subr.bf16.mxu0 0
  %58 = vmatpush1.bf16.msra.mxu0 0
  %59 = vmatprep.subr.bf16.mxu0 0
  %60 = vmatpush1.bf16.msra.mxu0 0
  %61 = vmatprep.subr.bf16.mxu0 0
  %62 = vmatpush1.bf16.msra.mxu0 0
  %63 = vmatprep.subr.bf16.mxu0 0
  %64 = vmatpush1.bf16.msra.mxu0 0
  %65 = vmatprep.subr.bf16.mxu0 0
  %66 = vmatpush1.bf16.msra.mxu0 0
  %67 = vmatprep.subr.bf16.mxu0 0
  %68 = vmatpush1.bf16.msra.mxu0 0
  %69 = vmatprep.subr.bf16.mxu0 0
  %70 = vmatpush1.bf16.msra.mxu0 0
  %71 = vmatprep.subr.bf16.mxu0 0
  %72 = vmatpush1.bf16.msra.mxu0 0
  %73 = vmatprep.subr.bf16.mxu0 0
  %74 = vmatpush1.bf16.msra.mxu0 0
  %75 = vmatprep.subr.bf16.mxu0 0
  %76 = vmatpush1.bf16.msra.mxu0 0
  %77 = vmatprep.subr.bf16.mxu0 0
  %78 = vmatpush1.bf16.msra.mxu0 0
  %79 = vmatprep.subr.bf16.mxu0 0
  %80 = vmatpush1.bf16.msra.mxu0 0
  %81 = vmatprep.subr.bf16.mxu0 0
  %82 = vmatpush1.bf16.msra.mxu0 0
  %83 = vmatprep.subr.bf16.mxu0 0
  %84 = vmatpush1.bf16.msra.mxu0 0
  %85 = vmatprep.mubr.bf16.mxu0 0
  %86 = vmatmul.mubr.bf16.gmra.mrb[0].mxu0 %v45
  %v87 = vpop.f32.mrb[0].mxu0
  %v88 = vadd.f32 0.0, %v87
  %v89 = vpop.f32.mrb[0].mxu0
  %v90 = vpop.f32.mrb[0].mxu0
  %v91 = vadd.f32 0.0, %v90
  %v92 = vpop.f32.mrb[0].mxu0
  %93 = vdwg.mxu0
  %v94 = vld [vmem:[%s1] sm:$0xf]
  %v95 = vld [vmem:[%s3] sm:$0xf]
  %v96 = vld [vmem:[%s3 + $0x4] sm:$0xf]
  %v97 = vld [vmem:[%s3 + $0x8] sm:$0xf]
  %v98 = vld [vmem:[%s3 + $0xc] sm:$0xf]
  %v99 = vld [vmem:[%s3 + $0x10] sm:$0xf]
  %v100 = vld [vmem:[%s3 + $0x14] sm:$0xf]
  %v101 = vld [vmem:[%s3 + $0x18] sm:$0xf]
  %v102 = vld [vmem:[%s3 + $0x1c] sm:$0xf]
  %v103 = vld [vmem:[%s3 + $0x20] sm:$0x3]
  %v113 = vunpack.c.l.b16 %v95
  %v114 = vunpack.c.l.b16 %v96
  %v115 = vunpack.c.l.b16 %v97
  %v116 = vunpack.c.l.b16 %v98
  %v117 = vunpack.c.l.b16 %v99
  %v118 = vunpack.c.l.b16 %v100
  %v119 = vunpack.c.l.b16 %v101
  %v120 = vunpack.c.l.b16 %v102
  %v121 = vunpack.c.l.b16 %v103
  %v122 = vpack.c.b16 %v114, %v113
  %v123 = vpack.c.b16 %v116, %v115
  %v124 = vpack.c.b16 %v118, %v117
  %v125 = vpack.c.b16 %v120, %v119
  %v126 = vpack.c.b16 %v121, %v121
  %vm131 = vcmask 556032
  %v133 = vsel %vm131, %v94, 0
  %vm135 = vcmask 1041408
  %v137 = vsel %vm135, %v126, 0
  %139 = vmatprep.subr.bf16.mxu0 0
  %140 = vmatpush1.bf16.msra.mxu0 %v122
  %141 = vmatprep.subr.bf16.mxu0 0
  %142 = vmatpush1.bf16.msra.mxu0 %v123
  %143 = vmatprep.subr.bf16.mxu0 0
  %144 = vmatpush1.bf16.msra.mxu0 %v124
  %145 = vmatprep.subr.bf16.mxu0 0
  %146 = vmatpush1.bf16.msra.mxu0 %v125
  %147 = vmatprep.subr.bf16.mxu0 0
  %148 = vmatpush1.bf16.msra.mxu0 %v137
  %149 = vmatprep.subr.bf16.mxu0 0
  %150 = vmatpush1.bf16.msra.mxu0 0
  %151 = vmatprep.subr.bf16.mxu0 0
  %152 = vmatpush1.bf16.msra.mxu0 0
  %153 = vmatprep.subr.bf16.mxu0 0
  %154 = vmatpush1.bf16.msra.mxu0 0
  %155 = vmatprep.subr.bf16.mxu0 0
  %156 = vmatpush1.bf16.msra.mxu0 0
  %157 = vmatprep.subr.bf16.mxu0 0
  %158 = vmatpush1.bf16.msra.mxu0 0
  %159 = vmatprep.subr.bf16.mxu0 0
  %160 = vmatpush1.bf16.msra.mxu0 0
  %161 = vmatprep.subr.bf16.mxu0 0
  %162 = vmatpush1.bf16.msra.mxu0 0
  %163 = vmatprep.subr.bf16.mxu0 0
  %164 = vmatpush1.bf16.msra.mxu0 0
  %165 = vmatprep.subr.bf16.mxu0 0
  %166 = vmatpush1.bf16.msra.mxu0 0
  %167 = vmatprep.subr.bf16.mxu0 0
  %168 = vmatpush1.bf16.msra.mxu0 0
  %169 = vmatprep.subr.bf16.mxu0 0
  %170 = vmatpush1.bf16.msra.mxu0 0
  %171 = vmatprep.mubr.bf16.mxu0 0
  %172 = vmatmul.mubr.bf16.gmra.mrb[0].mxu0 %v133
  %v173 = vpop.f32.mrb[0].mxu0
  %v174 = vadd.f32 0.0, %v173
  %v175 = vpop.f32.mrb[0].mxu0
  %v176 = vpop.f32.mrb[0].mxu0
  %v177 = vpop.f32.mrb[0].mxu0
  %178 = vdwg.mxu0
  %v180 = vcombine.high %v88, %v88
  %v184 = vunpack.c.l.s4 1966171168
  %v185 = vunpack.c.0.s8 %v184
  %v186 = vlaneseq
  %v187 = vshrl.u32 %v186, 7
  %v188 = vsub.s32 %v185, %v187
  %v189 = vrot.slane %v174, %v188
  %v190 = vcombine.high %v189, %v189
  %v192 = vunpack.c.l.s4 1966171168
  %v193 = vunpack.c.0.s8 %v192
  %v194 = vlaneseq
  %v195 = vshrl.u32 %v194, 7
  %v196 = vsub.s32 %v193, %v195
  %v197 = vrot.slane %v189, %v196
  %v199 = vunpack.c.l.s4 1966171168
  %v200 = vunpack.c.0.s8 %v199
  %v201 = vlaneseq
  %v202 = vshrl.u32 %v201, 7
  %v203 = vsub.s32 %v200, %v202
  %v204 = vrot.slane %v190, %v203
  %v205 = vcombine.high %v197, %v197
  %v206 = vlaneseq
  %v207 = vshrl.u32 %v206, 7
  %v208 = vsub.s32 0, %v207
  %v209 = vrot.slane %v197, %v208
  %v210 = vlaneseq
  %v211 = vshrl.u32 %v210, 7
  %v212 = vsub.s32 0, %v211
  %v213 = vrot.slane %v204, %v212
  %v214 = vlaneseq
  %v215 = vshrl.u32 %v214, 7
  %v216 = vsub.s32 0, %v215
  %v217 = vrot.slane %v205, %v216
  %v221 = vmul.f32 %v88, %v209
  %v222 = vmul.f32 %v180, %v213
  %v223 = vmul.f32 %v91, %v217
  %227 = vrot.lane.b32.xlu0 %v221, 96
  %v228 = vpop.permute.xlu0 %227
  %229 = vrot.lane.b32.xlu0 %v222, 96
  %v230 = vpop.permute.xlu0 %229
  %231 = vrot.lane.b32.xlu0 %v223, 96
  %v232 = vpop.permute.xlu0 %231
  %v236 = vadd.f32 %v221, %v228
  %v237 = vadd.f32 %v222, %v230
  %v238 = vadd.f32 %v223, %v232
  %v239 = vmul.f32 %v236, 0.70710677
  %v240 = vmul.f32 %v237, 0.70710677
  %v241 = vmul.f32 %v238, 0.70710677
  %245 = vrot.lane.b32.xlu0 %v239, 120
  %v246 = vpop.permute.xlu0 %245
  %247 = vrot.lane.b32.xlu0 %v240, 120
  %v248 = vpop.permute.xlu0 %247
  %249 = vrot.lane.b32.xlu0 %v241, 120
  %v250 = vpop.permute.xlu0 %249
  %v254 = vmax.f32 %v239, %v246
  %v255 = vmax.f32 %v240, %v248
  %v256 = vmax.f32 %v241, %v250
  %257 = vrot.lane.b32.xlu0 %v239, 112
  %v258 = vpop.permute.xlu0 %257
  %259 = vrot.lane.b32.xlu0 %v240, 112
  %v260 = vpop.permute.xlu0 %259
  %261 = vrot.lane.b32.xlu0 %v241, 112
  %v262 = vpop.permute.xlu0 %261
  %v266 = vmax.f32 %v254, %v258
  %v267 = vmax.f32 %v255, %v260
  %v268 = vmax.f32 %v256, %v262
  %269 = vrot.lane.b32.xlu0 %v239, 104
  %v270 = vpop.permute.xlu0 %269
  %271 = vrot.lane.b32.xlu0 %v240, 104
  %v272 = vpop.permute.xlu0 %271
  %273 = vrot.lane.b32.xlu0 %v241, 104
  %v274 = vpop.permute.xlu0 %273
  %v278 = vmax.f32 %v266, %v270
  %v279 = vmax.f32 %v267, %v272
  %v280 = vmax.f32 %v268, %v274
  %284 = vrot.lane.b32.xlu0 %v278, 8
  %v285 = vpop.permute.xlu0 %284
  %286 = vrot.lane.b32.xlu0 %v279, 8
  %v287 = vpop.permute.xlu0 %286
  %288 = vrot.lane.b32.xlu0 %v280, 8
  %v289 = vpop.permute.xlu0 %288
  %293 = vrot.lane.b32.xlu0 %v278, 16
  %v294 = vpop.permute.xlu0 %293
  %295 = vrot.lane.b32.xlu0 %v279, 16
  %v296 = vpop.permute.xlu0 %295
  %297 = vrot.lane.b32.xlu0 %v280, 16
  %v298 = vpop.permute.xlu0 %297
  %302 = vrot.lane.b32.xlu0 %v278, 24
  %v303 = vpop.permute.xlu0 %302
  %304 = vrot.lane.b32.xlu0 %v279, 24
  %v305 = vpop.permute.xlu0 %304
  %306 = vrot.lane.b32.xlu0 %v280, 24
  %v307 = vpop.permute.xlu0 %306
  %vm311 = vcmask 64512
  %v312 = vsel %vm311, %v278, %v285
  %v313 = vsel %vm311, %v279, %v287
  %v314 = vsel %vm311, %v280, %v289
  %vm315 = vcmask 130048
  %v316 = vsel %vm315, %v312, %v294
  %v317 = vsel %vm315, %v313, %v296
  %v318 = vsel %vm315, %v314, %v298
  %vm319 = vcmask 195584
  %v320 = vsel %vm319, %v316, %v303
  %v321 = vsel %vm319, %v317, %v305
  %v322 = vsel %vm319, %v318, %v307
  %v323 = vsub.f32 %v239, %v320
  %v324 = vsub.f32 %v240, %v321
  %v325 = vsub.f32 %v241, %v322
  %v326 = vmul.f32 %v323, 1.442695
  %v327 = vpow.pop %v326
  %v328 = vmul.f32 %v324, 1.442695
  %v329 = vpow.pop %v328
  %v330 = vmul.f32 %v325, 1.442695
  %v331 = vpow.pop %v330
  %335 = vrot.lane.b32.xlu0 %v327, 120
  %v336 = vpop.permute.xlu0 %335
  %337 = vrot.lane.b32.xlu0 %v329, 120
  %v338 = vpop.permute.xlu0 %337
  %339 = vrot.lane.b32.xlu0 %v331, 120
  %v340 = vpop.permute.xlu0 %339
  %v344 = vadd.f32 %v327, %v336
  %v345 = vadd.f32 %v329, %v338
  %v346 = vadd.f32 %v331, %v340
  %347 = vrot.lane.b32.xlu0 %v327, 112
  %v348 = vpop.permute.xlu0 %347
  %349 = vrot.lane.b32.xlu0 %v329, 112
  %v350 = vpop.permute.xlu0 %349
  %351 = vrot.lane.b32.xlu0 %v331, 112
  %v352 = vpop.permute.xlu0 %351
  %v356 = vadd.f32 %v344, %v348
  %v357 = vadd.f32 %v345, %v350
  %v358 = vadd.f32 %v346, %v352
  %359 = vrot.lane.b32.xlu0 %v327, 104
  %v360 = vpop.permute.xlu0 %359
  %361 = vrot.lane.b32.xlu0 %v329, 104
  %v362 = vpop.permute.xlu0 %361
  %363 = vrot.lane.b32.xlu0 %v331, 104
  %v364 = vpop.permute.xlu0 %363
  %v368 = vadd.f32 %v356, %v360
  %v369 = vadd.f32 %v357, %v362
  %v370 = vadd.f32 %v358, %v364
  %v371 = vrcp.pop %v368
  %v372 = vrcp.pop %v369
  %v373 = vrcp.pop %v370
  %377 = vrot.lane.b32.xlu0 %v371, 8
  %v378 = vpop.permute.xlu0 %377
  %379 = vrot.lane.b32.xlu0 %v372, 8
  %v380 = vpop.permute.xlu0 %379
  %381 = vrot.lane.b32.xlu0 %v373, 8
  %v382 = vpop.permute.xlu0 %381
  %386 = vrot.lane.b32.xlu0 %v371, 16
  %v387 = vpop.permute.xlu0 %386
  %388 = vrot.lane.b32.xlu0 %v372, 16
  %v389 = vpop.permute.xlu0 %388
  %390 = vrot.lane.b32.xlu0 %v373, 16
  %v391 = vpop.permute.xlu0 %390
  %395 = vrot.lane.b32.xlu0 %v371, 24
  %v396 = vpop.permute.xlu0 %395
  %397 = vrot.lane.b32.xlu0 %v372, 24
  %v398 = vpop.permute.xlu0 %397
  %399 = vrot.lane.b32.xlu0 %v373, 24
  %v400 = vpop.permute.xlu0 %399
  %v404 = vsel %vm311, %v371, %v378
  %v405 = vsel %vm311, %v372, %v380
  %v406 = vsel %vm311, %v373, %v382
  %v407 = vsel %vm315, %v404, %v387
  %v408 = vsel %vm315, %v405, %v389
  %v409 = vsel %vm315, %v406, %v391
  %v410 = vsel %vm319, %v407, %v396
  %v411 = vsel %vm319, %v408, %v398
  %v412 = vsel %vm319, %v409, %v400
  %v413 = vmul.f32 %v327, %v410
  %v414 = vmul.f32 %v329, %v411
  %v415 = vmul.f32 %v331, %v412
  %416 = vrot.lane.b32.xlu0 %v209, 64
  %v417 = vpop.permute.xlu0 %416
  %418 = vrot.lane.b32.xlu0 %v213, 64
  %v419 = vpop.permute.xlu0 %418
  %420 = vrot.lane.b32.xlu0 %v217, 64
  %v421 = vpop.permute.xlu0 %420
  %v425 = vmul.f32 %v413, %v417
  %v426 = vmul.f32 %v414, %v419
  %v427 = vmul.f32 %v415, %v421
  %v430 = vcombine.low %v425, %v426
  %v432 = vpack.c.bf16 %v427, %v430
  %433 = vrot.lane.b32.xlu0 %v209, 32
  %v434 = vpop.permute.xlu0 %433
  %435 = vrot.lane.b32.xlu0 %v213, 32
  %v436 = vpop.permute.xlu0 %435
  %437 = vrot.lane.b32.xlu0 %v217, 32
  %v438 = vpop.permute.xlu0 %437
  %v442 = vmul.f32 %v413, %v434
  %v443 = vmul.f32 %v414, %v436
  %v444 = vmul.f32 %v415, %v438
  %v447 = vcombine.low %v442, %v443
  %v449 = vpack.c.bf16 %v444, %v447
  %v450 = vld [vmem:[%s4] sm:$0xf]
  %v451 = vld [vmem:[%s4 + $0x4] sm:$0xf]
  %v452 = vld [vmem:[%s4 + $0x8] sm:$0xf]
  %v453 = vld [vmem:[%s4 + $0xc] sm:$0xf]
  %v454 = vld [vmem:[%s4 + $0x10] sm:$0xf]
  %v455 = vld [vmem:[%s4 + $0x14] sm:$0xf]
  %v456 = vld [vmem:[%s4 + $0x18] sm:$0xf]
  %v457 = vld [vmem:[%s4 + $0x1c] sm:$0xf]
  %v462 = vunpack.c.l.b16 %v454
  %v463 = vunpack.c.l.b16 %v455
  %v464 = vunpack.c.l.b16 %v456
  %v465 = vunpack.c.l.b16 %v457
  %v466 = vpack.c.b16 %v463, %v462
  %v467 = vpack.c.b16 %v465, %v464
  %vm470 = vcmask 261120
  %v472 = vsel %vm470, %v449, 0
  %474 = vmatprep.subr.bf16.mxu0 0
  %475 = vmatpush1.bf16.msra.mxu0 %v466
  %476 = vmatprep.subr.bf16.mxu0 0
  %477 = vmatpush1.bf16.msra.mxu0 %v467
  %478 = vmatprep.subr.bf16.mxu0 0
  %479 = vmatpush1.bf16.msra.mxu0 0
  %480 = vmatprep.subr.bf16.mxu0 0
  %481 = vmatpush1.bf16.msra.mxu0 0
  %482 = vmatprep.subr.bf16.mxu0 0
  %483 = vmatpush1.bf16.msra.mxu0 0
  %484 = vmatprep.subr.bf16.mxu0 0
  %485 = vmatpush1.bf16.msra.mxu0 0
  %486 = vmatprep.subr.bf16.mxu0 0
  %487 = vmatpush1.bf16.msra.mxu0 0
  %488 = vmatprep.subr.bf16.mxu0 0
  %489 = vmatpush1.bf16.msra.mxu0 0
  %490 = vmatprep.subr.bf16.mxu0 0
  %491 = vmatpush1.bf16.msra.mxu0 0
  %492 = vmatprep.subr.bf16.mxu0 0
  %493 = vmatpush1.bf16.msra.mxu0 0
  %494 = vmatprep.subr.bf16.mxu0 0
  %495 = vmatpush1.bf16.msra.mxu0 0
  %496 = vmatprep.subr.bf16.mxu0 0
  %497 = vmatpush1.bf16.msra.mxu0 0
  %498 = vmatprep.subr.bf16.mxu0 0
  %499 = vmatpush1.bf16.msra.mxu0 0
  %500 = vmatprep.subr.bf16.mxu0 0
  %501 = vmatpush1.bf16.msra.mxu0 0
  %502 = vmatprep.subr.bf16.mxu0 0
  %503 = vmatpush1.bf16.msra.mxu0 0
  %504 = vmatprep.subr.bf16.mxu0 0
  %505 = vmatpush1.bf16.msra.mxu0 0
  %506 = vmatprep.mubr.bf16.mxu0 0
  %507 = vmatmul.mubr.bf16.gmra.mrb[0].mxu0 %v472
  %v508 = vpop.f32.mrb[0].mxu0
  %v509 = vadd.f32 0.0, %v508
  %v510 = vpop.f32.mrb[0].mxu0
  %v511 = vpop.f32.mrb[0].mxu0
  %v512 = vadd.f32 0.0, %v511
  %v513 = vpop.f32.mrb[0].mxu0
  %514 = vdwg.mxu0
  %v519 = vunpack.c.l.b16 %v450
  %v520 = vunpack.c.l.b16 %v451
  %v521 = vunpack.c.l.b16 %v452
  %v522 = vunpack.c.l.b16 %v453
  %v523 = vpack.c.b16 %v520, %v519
  %v524 = vpack.c.b16 %v522, %v521
  %v528 = vsel %vm470, %v432, 0
  %530 = vmatprep.subr.bf16.mxu0 0
  %531 = vmatpush1.bf16.msra.mxu0 %v523
  %532 = vmatprep.subr.bf16.mxu0 0
  %533 = vmatpush1.bf16.msra.mxu0 %v524
  %534 = vmatprep.subr.bf16.mxu0 0
  %535 = vmatpush1.bf16.msra.mxu0 0
  %536 = vmatprep.subr.bf16.mxu0 0
  %537 = vmatpush1.bf16.msra.mxu0 0
  %538 = vmatprep.subr.bf16.mxu0 0
  %539 = vmatpush1.bf16.msra.mxu0 0
  %540 = vmatprep.subr.bf16.mxu0 0
  %541 = vmatpush1.bf16.msra.mxu0 0
  %542 = vmatprep.subr.bf16.mxu0 0
  %543 = vmatpush1.bf16.msra.mxu0 0
  %544 = vmatprep.subr.bf16.mxu0 0
  %545 = vmatpush1.bf16.msra.mxu0 0
  %546 = vmatprep.subr.bf16.mxu0 0
  %547 = vmatpush1.bf16.msra.mxu0 0
  %548 = vmatprep.subr.bf16.mxu0 0
  %549 = vmatpush1.bf16.msra.mxu0 0
  %550 = vmatprep.subr.bf16.mxu0 0
  %551 = vmatpush1.bf16.msra.mxu0 0
  %552 = vmatprep.subr.bf16.mxu0 0
  %553 = vmatpush1.bf16.msra.mxu0 0
  %554 = vmatprep.subr.bf16.mxu0 0
  %555 = vmatpush1.bf16.msra.mxu0 0
  %556 = vmatprep.subr.bf16.mxu0 0
  %557 = vmatpush1.bf16.msra.mxu0 0
  %558 = vmatprep.subr.bf16.mxu0 0
  %559 = vmatpush1.bf16.msra.mxu0 0
  %560 = vmatprep.subr.bf16.mxu0 0
  %561 = vmatpush1.bf16.msra.mxu0 0
  %562 = vmatprep.mubr.bf16.mxu0 0
  %563 = vmatmul.mubr.bf16.gmra.mrb[0].mxu0 %v528
  %v564 = vpop.f32.mrb[0].mxu0
  %v565 = vadd.f32 %v509, %v564
  %v566 = vpop.f32.mrb[0].mxu0
  %v567 = vpop.f32.mrb[0].mxu0
  %v568 = vadd.f32 %v512, %v567
  %v569 = vpop.f32.mrb[0].mxu0
  %570 = vdwg.mxu0
  %v571 = vld [vmem:[%s5] sm:$0x1]
  %v573 = vlaneseq
  %v574 = vshrl.u32 %v573, 7
  %v575 = vsub.s32 0, %v574
  %v576 = vrot.slane %v571, %v575
  %v578 = vadd.f32 %v565, %v576
  %v579 = vadd.f32 %v568, %v576
  %580 = vst.msk [vmem:[%s6] sm:$0xff] %vm315, %v578
  %vm581 = vcmask 125952
  %582 = vst.msk [vmem:[%s6 + $0x8] sm:$0xf] %vm581, %v579
  // Predicated region
  $region26: #{multi_head_attention.1} parent=0 // pred_check
    _
  $region27: #{multi_head_attention.1} parent=0 // pred_check_branch
    %584 = sbr.rel (0) target = $region29
  $region28: #{multi_head_attention.1} parent=0 // pred_region
    _
  $region29: #{multi_head_attention.1} parent=0 // pred_fallthru
    _
  // Predicated region
  $region30: #{multi_head_attention.1} parent=0 // pred_check
    _
  $region31: #{multi_head_attention.1} parent=0 // pred_check_branch
    %586 = sbr.rel (0) target = $region33
  $region32: #{multi_head_attention.1} parent=0 // pred_region
    _
  $region33: #{multi_head_attention.1} parent=0 // pred_fallthru
    _

</llo_original>
